<compile_context>
chip_gen: v6e
topology: v6e:2x2x1
jax: 0.10.0
libtpu: 0.0.40
codegen_flags: <defaults>
</compile_context>

<pallas_src>
from dataclasses import dataclass

import jax
import jax.numpy as jnp
from jax.experimental import pallas as pl
from jax.experimental.pallas import tpu as pltpu


@dataclass
class TrainingConfig:
    """Configuration for model training (mirrors the PyTorch dataclass)."""
    batch_size: int
    num_epochs: int
    learning_rate: float
    weight_decay: float
    factor: float
    patience: int
    delta: float
    train_test_split: float = 0.6
    test_val_split: float = 0.8
    device: str = "tpu"


# ----------------------------- DMA copy kernel ---------------------------- #

_N_BUF = 3            # max outstanding DMAs
_CHUNK_BYTES = 16 << 20   # ~16 MiB per DMA chunk
_MAX_CHUNKS = 64      # cap on the static unroll of the issue loop


def _cdiv(a: int, b: int) -> int:
    return -(-a // b)


def _plan_slab(total: int) -> tuple[int, int]:
    """Pick a (rows, lanes) 2-D view of the flat tensor.

    Lane-dense (lanes multiple of 128, rows >= 8) when the element count
    allows it; otherwise a single-row slab (DMA is index-based, so any shape
    is legal -- this is only a layout nicety).
    """
    if total % 128 == 0:
        for cand in (4096, 2048, 1024, 512, 256, 128):
            if total % cand == 0 and (total // cand) >= 8:
                return total // cand, cand
        for cand in (4096, 2048, 1024, 512, 256, 128):
            if total % cand == 0:
                return total // cand, cand
    return 1, total


def _plan_chunks(rows: int, lanes: int, itemsize: int) -> tuple[int, int, int]:
    """Chunking plan: (axis to chunk along, chunk extent, number of chunks)."""
    if rows > 1:
        axis, extent, other, quantum = 0, rows, lanes, {4: 8, 2: 16, 1: 32}.get(itemsize, 8)
    else:
        axis, extent, other, quantum = 1, lanes, rows, 128
    bytes_per_unit = max(1, other * itemsize)

    chunk = (_CHUNK_BYTES // bytes_per_unit // quantum) * quantum
    if chunk <= 0:
        chunk = extent                      # tiny slice unit: one whole-slab DMA
    chunk = min(chunk, extent)
    n_chunks = _cdiv(extent, chunk)
    if n_chunks > _MAX_CHUNKS:              # keep static unroll bounded
        chunk = min(extent, _cdiv(_cdiv(extent, _MAX_CHUNKS), quantum) * quantum)
        n_chunks = _cdiv(extent, chunk)
    return axis, chunk, n_chunks


def _make_dma_identity_kernel(shape, axis, chunk, n_chunks, n_buf):
    """Copy x_ref -> o_ref via chunked HBM->HBM DMAs, n_buf outstanding."""
    extent = shape[axis]

    def kernel(x_ref, o_ref, sems):
        copies = []
        for c in range(n_chunks):            # static unroll (n_chunks <= 64)
            start = c * chunk
            stop = min(start + chunk, extent)
            if axis == 0:
                src, dst = x_ref.at[start:stop, :], o_ref.at[start:stop, :]
            else:
                src, dst = x_ref.at[:, start:stop], o_ref.at[:, start:stop]
            cp = pltpu.make_async_copy(src, dst, sems.at[c % n_buf])
            if c >= n_buf:
                copies[c - n_buf].wait()      # free this semaphore slot first
            cp.start()
            copies.append(cp)
        for cp in copies[-n_buf:]:            # drain the tail of the pipeline
            cp.wait()

    return kernel


@jax.jit
def _identity_forward(x: jax.Array) -> jax.Array:
    """Identity forward: chunked HBM->HBM DMA copy (no VMEM round trip)."""
    total = int(x.size)
    if total == 0:
        return x

    orig_shape = x.shape
    itemsize = jnp.dtype(x.dtype).itemsize
    rows, lanes = _plan_slab(total)
    axis, chunk, n_chunks = _plan_chunks(rows, lanes, itemsize)
    n_buf = min(_N_BUF, n_chunks)

    kernel = _make_dma_identity_kernel((rows, lanes), axis, chunk, n_chunks, n_buf)
    x2d = x.reshape(rows, lanes)              # contiguous row-major: metadata only

    y2d = pl.pallas_call(
        kernel,
        out_shape=jax.ShapeDtypeStruct((rows, lanes), x.dtype),
        in_specs=[pl.BlockSpec(memory_space=pl.ANY)],     # raw HBM ref
        out_specs=pl.BlockSpec(memory_space=pl.ANY),      # raw HBM ref
        scratch_shapes=[pltpu.SemaphoreType.DMA((n_buf,))],
        # NOTE: no input_output_aliases -- the caller does not donate x, and
        # aliasing a non-donated input forces a defensive full-tensor copy.
    )(x2d)
    return y2d.reshape(orig_shape)


# --------------------------------- model ----------------------------------- #

class BaseModel:
    """JAX/Pallas analogue of the abstract PyTorch BaseModel.

    The reference forward is abstract (no compute), so this forward is the
    identity, executed as a Pallas TPU HBM->HBM DMA copy kernel.
    """

    def __init__(self, config: TrainingConfig):
        self.config = config
        # TODO(synk): abstract forward defines no parameters or compute; only
        # the identity shape/dtype contract is translatable.

    def forward(self, x: jax.Array) -> jax.Array:
        return _identity_forward(x)

    def __call__(self, x: jax.Array) -> jax.Array:
        return self.forward(x)


# --------------------------------- main ------------------------------------ #

if __name__ == "__main__":
    cfg = TrainingConfig(
        batch_size=2,
        num_epochs=1,
        learning_rate=1e-3,
        weight_decay=0.0,
        factor=0.5,
        patience=3,
        delta=1e-4,
    )
    model = BaseModel(cfg)

    key = jax.random.PRNGKey(0)
    # Small NCHW input consistent with a conv-style model: (2, 4, 16, 16).
    x = jax.random.normal(key, (2, 4, 16, 16), dtype=jnp.float32)

    y = model(x)
    y = jax.block_until_ready(y)

    assert y.shape == x.shape and y.dtype == x.dtype
    assert bool(jnp.allclose(y, x)), "identity forward mismatch"
    print("KERNEL_OK")
</pallas_src>

<mosaic_0001>
module attributes {stable_mosaic.version = 11 : i64} {
  func.func @kernel(%arg0: memref<8x256xf32, #tpu.memory_space<any>>, %arg1: memref<8x256xf32, #tpu.memory_space<any>>, %arg2: memref<1x!tpu.dma_semaphore, #tpu.memory_space<semaphore_mem>>) attributes {dimension_semantics = [], scalar_prefetch = 0 : i64, scratch_operands = 1 : i64, tpu.core_type = #tpu.core_type<tc>} {
    %c0_i32 = arith.constant 0 : i32
    %c0_i32_0 = arith.constant 0 : i32
    %c0_i32_1 = arith.constant 0 : i32
    %0 = tpu.memref_slice %arg0[%c0_i32_0, %c0_i32_1] : memref<8x256xf32, #tpu.memory_space<any>> -> memref<8x256xf32, #tpu.memory_space<any>>
    %c0_i32_2 = arith.constant 0 : i32
    %c0_i32_3 = arith.constant 0 : i32
    %1 = tpu.memref_slice %arg1[%c0_i32_2, %c0_i32_3] : memref<8x256xf32, #tpu.memory_space<any>> -> memref<8x256xf32, #tpu.memory_space<any>>
    %2 = tpu.memref_slice %arg2[%c0_i32] : memref<1x!tpu.dma_semaphore, #tpu.memory_space<semaphore_mem>> -> memref<1x!tpu.dma_semaphore, #tpu.memory_space<semaphore_mem>>
    %3 = tpu.memref_squeeze %2 : memref<1x!tpu.dma_semaphore, #tpu.memory_space<semaphore_mem>> -> memref<!tpu.dma_semaphore, #tpu.memory_space<semaphore_mem>>
    tpu.enqueue_dma source(%0 : memref<8x256xf32, #tpu.memory_space<any>>) target(%1 : memref<8x256xf32, #tpu.memory_space<any>>) target_semaphore(%3 : memref<!tpu.dma_semaphore, #tpu.memory_space<semaphore_mem>>)
    %c0_i32_4 = arith.constant 0 : i32
    %c0_i32_5 = arith.constant 0 : i32
    %c0_i32_6 = arith.constant 0 : i32
    %4 = tpu.memref_slice %arg0[%c0_i32_5, %c0_i32_6] : memref<8x256xf32, #tpu.memory_space<any>> -> memref<8x256xf32, #tpu.memory_space<any>>
    %c0_i32_7 = arith.constant 0 : i32
    %c0_i32_8 = arith.constant 0 : i32
    %5 = tpu.memref_slice %arg1[%c0_i32_7, %c0_i32_8] : memref<8x256xf32, #tpu.memory_space<any>> -> memref<8x256xf32, #tpu.memory_space<any>>
    %6 = tpu.memref_slice %arg2[%c0_i32_4] : memref<1x!tpu.dma_semaphore, #tpu.memory_space<semaphore_mem>> -> memref<1x!tpu.dma_semaphore, #tpu.memory_space<semaphore_mem>>
    %7 = tpu.memref_squeeze %6 : memref<1x!tpu.dma_semaphore, #tpu.memory_space<semaphore_mem>> -> memref<!tpu.dma_semaphore, #tpu.memory_space<semaphore_mem>>
    tpu.wait_dma2 semaphore(%7 : memref<!tpu.dma_semaphore, #tpu.memory_space<semaphore_mem>>) src(%4 : memref<8x256xf32, #tpu.memory_space<any>>) dst(%5 : memref<8x256xf32, #tpu.memory_space<any>>)
    return
  }
}

</mosaic_0001>

<llo_original>
// kernel: _identity_forward.1
$region0: #{_identity_forward.1}
  #allocation0 [shape = 'u32[]', space=smem, size = 0x4, offset = 0x4, fixed_abs, tag = 'smem constant byte address 0x4 - core index']
  #allocation1 [shape = 'u32[144,128]{1,0:T(1,128)}', space=vmem, size = 0x12000, scoped, tag = 'internal scratch']
  #allocation2 [shape = 's32[1]{0}', space=sflag, size = 0x4, scoped, tag = 'scratch operand']
  #allocation3 [shape = 's32[]', space=sflag, size = 0x4, offset = 0, fixed_abs, tag = 'sflag constant byte address 0x0 - dummy sync flag']
  %s0 = inlined_call_operand.vmem [shape: f32[8,256], index: 0, kind: input, shape index: {}]
  %s1 = inlined_call_operand.vmem [shape: f32[8,256], index: 1, kind: output, shape index: {}]
  %s2 = sld [smem:[#allocation0]]
  $region36: #{_identity_forward.1} parent=0
    _
  %s4 = ssub.s32 1, %s2
  %s5 = scalar_select 0, %s4, %s2
  %p7 = scmp.lt.u32.totalorder 16, 8
  %p8 = pneg %p7
  // Predicated region
  $region2: #{_identity_forward.1} parent=0 // pred_check
    _
  $region3: #{_identity_forward.1} parent=0 // pred_check_branch
    %10 = sbr.rel (%p7) target = $region5
  $region4: #{_identity_forward.1} parent=0 // pred_region
    %s26 = sand.u32 16, 7
    %p27 = scmp.eq.s32.totalorder %s26, 0
    // Predicated region
    $region17: #{_identity_forward.1} parent=4 // pred_check
      %p28 = pneg %p27
    $region18: #{_identity_forward.1} parent=4 // pred_check_branch
      %30 = sbr.rel (%p28) target = $region20
    $region19: #{_identity_forward.1} parent=4 // pred_region
      loop: start=0, step=1, limit=1
      $region21: #{_identity_forward.1} parent=19 // loop_pre_header
        _
      $region22: #{_identity_forward.1} parent=19 // loop_header
        %s32 = sphi 0, %s36
        %p33 = scmp.ge.s32.totalorder %s32, 1
        %s37 = sphi %s0, %s0
        %s38 = sphi %s1, %s1
      $region23: #{_identity_forward.1} parent=19 // loop_header_branch
        %35 = sbr.rel (%p33) target = $region27
      $region24: #{_identity_forward.1} parent=19 // loop_body
        %v39 = vld [vmem:[%s37] sm:$0xff]
        %40 = vst [vmem:[%s38] sm:$0xff] %v39
        %v41 = vld [vmem:[%s37 + $0x8] sm:$0xff]
        %42 = vst [vmem:[%s38 + $0x8] sm:$0xff] %v41
      $region25: #{_identity_forward.1} parent=19 // loop_footer
        %s36 = sadd.s32 1, %s32
      $region26: #{_identity_forward.1} parent=19 // loop_footer_branch
        %31 = sbr.rel target = $region22
      $region27: #{_identity_forward.1} parent=19 // loop_exit
        _
    $region20: #{_identity_forward.1} parent=4 // pred_fallthru
      _
    %p43 = pneg %p27
    // Predicated region
    $region28: #{_identity_forward.1} parent=4 // pred_check
      _
    $region29: #{_identity_forward.1} parent=4 // pred_check_branch
      %45 = sbr.rel (%p27) target = $region31
    $region30: #{_identity_forward.1} parent=4 // pred_region
      %s46 = sand.u32 16, 7
    $region31: #{_identity_forward.1} parent=4 // pred_fallthru
      _
  $region5: #{_identity_forward.1} parent=0 // pred_fallthru
    _
  // Predicated region
  $region6: #{_identity_forward.1} parent=0 // pred_check
    %p11 = pneg %p7
  $region7: #{_identity_forward.1} parent=0 // pred_check_branch
    %13 = sbr.rel (%p11) target = $region9
  $region8: #{_identity_forward.1} parent=0 // pred_region
    %s14 = sshll.u32 1, 16
    %s15 = ssub.s32 %s14, 1
    loop: start=0, step=1, limit=1
    $region10: #{_identity_forward.1} parent=8 // loop_pre_header
      _
    $region11: #{_identity_forward.1} parent=8 // loop_header
      %s17 = sphi 0, %s21
      %p18 = scmp.ge.s32.totalorder %s17, 1
      %s22 = sphi %s0, %s0
      %s23 = sphi %s1, %s1
    $region12: #{_identity_forward.1} parent=8 // loop_header_branch
      %20 = sbr.rel (%p18) target = $region16
    $region13: #{_identity_forward.1} parent=8 // loop_body
      %v24 = vld [vmem:[%s22] sm:%s15]
      %25 = vst [vmem:[%s23] sm:%s15] %v24
    $region14: #{_identity_forward.1} parent=8 // loop_footer
      %s21 = sadd.s32 1, %s17
    $region15: #{_identity_forward.1} parent=8 // loop_footer_branch
      %16 = sbr.rel target = $region11
    $region16: #{_identity_forward.1} parent=8 // loop_exit
      _
  $region9: #{_identity_forward.1} parent=0 // pred_fallthru
    _
  // Predicated region
  $region32: #{_identity_forward.1} parent=0 // pred_check
    _
  $region33: #{_identity_forward.1} parent=0 // pred_check_branch
    %49 = sbr.rel (0) target = $region35
  $region34: #{_identity_forward.1} parent=0 // pred_region
    %50 = vsyncadd [#allocation2], 256
  $region35: #{_identity_forward.1} parent=0 // pred_fallthru
    _
  %s51 = smul.u32 8, 1
  %s52 = smul.u32 %s51, 2
  %s53 = sshll.u32 %s52, 4
  %54 = dma.done [#allocation2], %s53
  %55 = vsyncmov [#allocation2]
  %s56 = vpop.sfrf %55
  %p57 = scmp.eq.s32.totalorder %s56, 0
  %p58 = pneg %p57
  %60 = shalt.err (%p58)

</llo_original>
